<compile_context>
chip_gen: v7x
topology: tpu7x:2x2x1
jax: 0.10.0
libtpu: 0.0.40
codegen_flags: <defaults>
</compile_context>

<pallas_src>
import functools
import math

import jax
import jax.numpy as jnp
from jax.experimental import pallas as pl
from jax.experimental.pallas import tpu as pltpu

BN_EPS = 1e-5
CONV_DTYPE = jnp.bfloat16   # matmul operand dtype; accumulation is always f32


# ----------------------------------------------------------------------------
# Pallas kernels
# ----------------------------------------------------------------------------
def _layer_kernel(xcol_ref, w_ref, b_ref, gamma_ref, beta_ref, out_ref, *,
                  nl_real):
    """Masked Conv1d (as one matmul) + bias + BatchNorm1d(train) + ReLU.

    xcol_ref : (C_in*K, NLp)  im2col operand, NLp = N*L padded to mult. of 128
    w_ref    : (TC, C_in*K)   channel tile of the (pre-masked) conv weight
    b_ref / gamma_ref / beta_ref : (TC, 1)
    out_ref  : (TC, NLp)      normalized + ReLU activations (pad cols zeroed)
    """
    nlp = out_ref.shape[1]
    x = xcol_ref[...]
    yc = jnp.dot(w_ref[...].astype(x.dtype), x,
                 preferred_element_type=jnp.float32) + b_ref[...]

    # Mask out the padded batch columns from the batch statistics.
    col = jax.lax.broadcasted_iota(jnp.int32, (1, nlp), 1)
    m = (col < nl_real).astype(jnp.float32)
    inv_n = 1.0 / float(nl_real)
    mean = jnp.sum(yc * m, axis=1, keepdims=True) * inv_n
    d = (yc - mean) * m
    var = jnp.sum(d * d, axis=1, keepdims=True) * inv_n        # biased (train)
    y = d * jax.lax.rsqrt(var + BN_EPS) * gamma_ref[...] + beta_ref[...]
    out_ref[...] = jnp.maximum(y, 0.0) * m


def _layer_pool_kernel(xcol_ref, w_ref, b_ref, gamma_ref, beta_ref, pm_ref,
                       pooled_ref, *, nl_real):
    """Same as _layer_kernel, with AdaptiveAvgPool1d(1) fused as an epilogue.

    Only the pooled (TC, Np) result is written; the full activation never
    leaves the kernel (saves the (N, C, L) HBM round-trip before the head).
    """
    nlp = xcol_ref.shape[1]
    x = xcol_ref[...]
    yc = jnp.dot(w_ref[...].astype(x.dtype), x,
                 preferred_element_type=jnp.float32) + b_ref[...]

    col = jax.lax.broadcasted_iota(jnp.int32, (1, nlp), 1)
    m = (col < nl_real).astype(jnp.float32)
    inv_n = 1.0 / float(nl_real)
    mean = jnp.sum(yc * m, axis=1, keepdims=True) * inv_n
    d = (yc - mean) * m
    var = jnp.sum(d * d, axis=1, keepdims=True) * inv_n
    y = d * jax.lax.rsqrt(var + BN_EPS) * gamma_ref[...] + beta_ref[...]
    y = jnp.maximum(y, 0.0) * m

    # Mean over L per (channel, batch) via a static pooling matrix (MXU).
    pooled_ref[...] = jnp.dot(y, pm_ref[...], preferred_element_type=jnp.float32)


def _head_kernel(pooled_ref, wT_ref, b_ref, out_ref):
    """Linear head: (Np, C_out) @ (C_out, n_class_padded) + bias."""
    out_ref[...] = jnp.dot(pooled_ref[...], wT_ref[...],
                           preferred_element_type=jnp.float32) + b_ref[...]


# ----------------------------------------------------------------------------
# Wrappers (pallas_call plumbing + plain-JAX glue)
# ----------------------------------------------------------------------------
def _channel_tile(c_out):
    # Sublane-aligned channel tiles; prefer >=2 grid steps so the "parallel"
    # axis can be sharded across TensorCores (v7x megacore).
    for t in (128, 64, 32, 16, 8):
        if c_out % t == 0 and c_out // t >= 2:
            return t
    for t in (128, 64, 32, 16, 8):
        if c_out % t == 0:
            return t
    return c_out


def _im2col(h, seq_len, max_k):
    """h: (C, Np, L) channel-major activations -> (C*K, Np*L) im2col operand."""
    c, n_b, _ = h.shape
    lp, rp = (max_k - 1) // 2, max_k // 2          # nn.ConstantPad1d((lp, rp), 0)
    hp = jnp.pad(h, ((0, 0), (0, 0), (lp, rp)))
    taps = jnp.stack([hp[:, :, k:k + seq_len] for k in range(max_k)], axis=1)
    return taps.reshape(c * max_k, n_b * seq_len)  # row index = c*K + k


def _pooling_matrix(nlp, n_batch_pad, seq_len, nl_real):
    j = jnp.arange(nlp)[:, None]
    n = jnp.arange(n_batch_pad)[None, :]
    pm = ((j // seq_len) == n) & (j < nl_real)
    return pm.astype(jnp.float32) * (1.0 / seq_len)


def _layer_specs(tc, cink, nlp):
    return [
        pl.BlockSpec((cink, nlp), lambda i: (0, 0)),   # im2col operand: resident
        pl.BlockSpec((tc, cink), lambda i: (i, 0)),    # weight tile
        pl.BlockSpec((tc, 1), lambda i: (i, 0)),       # bias
        pl.BlockSpec((tc, 1), lambda i: (i, 0)),       # gamma
        pl.BlockSpec((tc, 1), lambda i: (i, 0)),       # beta
    ]


def _run_layer(xcol, params, nl_real):
    w2d = params["w2d"]
    c_out, cink = w2d.shape
    nlp = xcol.shape[1]
    tc = _channel_tile(c_out)
    return pl.pallas_call(
        functools.partial(_layer_kernel, nl_real=nl_real),
        out_shape=jax.ShapeDtypeStruct((c_out, nlp), jnp.float32),
        grid_spec=pltpu.PrefetchScalarGridSpec(
            num_scalar_prefetch=0,
            grid=(c_out // tc,),
            in_specs=_layer_specs(tc, cink, nlp),
            out_specs=pl.BlockSpec((tc, nlp), lambda i: (i, 0)),
        ),
        compiler_params=pltpu.CompilerParams(dimension_semantics=("parallel",)),
    )(xcol.astype(CONV_DTYPE), w2d, params["bias"], params["gamma"],
      params["beta"])


def _run_layer_pool(xcol, params, pool_mat, nl_real):
    w2d = params["w2d"]
    c_out, cink = w2d.shape
    nlp = xcol.shape[1]
    n_batch_pad = pool_mat.shape[1]
    tc = _channel_tile(c_out)
    return pl.pallas_call(
        functools.partial(_layer_pool_kernel, nl_real=nl_real),
        out_shape=jax.ShapeDtypeStruct((c_out, n_batch_pad), jnp.float32),
        grid_spec=pltpu.PrefetchScalarGridSpec(
            num_scalar_prefetch=0,
            grid=(c_out // tc,),
            in_specs=_layer_specs(tc, cink, nlp)
                     + [pl.BlockSpec((nlp, n_batch_pad), lambda i: (0, 0))],
            out_specs=pl.BlockSpec((tc, n_batch_pad), lambda i: (i, 0)),
        ),
        compiler_params=pltpu.CompilerParams(dimension_semantics=("parallel",)),
    )(xcol.astype(CONV_DTYPE), w2d, params["bias"], params["gamma"],
      params["beta"], pool_mat)


def _run_head(pooled_t, hidden_w, hidden_b):
    n_batch_pad, c_out = pooled_t.shape
    n_class = hidden_w.shape[0]
    ncp = ((n_class + 127) // 128) * 128           # lane-dense head output
    wT = jnp.zeros((c_out, ncp), jnp.float32).at[:, :n_class].set(hidden_w.T)
    b = jnp.zeros((1, ncp), jnp.float32).at[:, :n_class].set(
        hidden_b.reshape(1, -1))
    return pl.pallas_call(
        _head_kernel,
        out_shape=jax.ShapeDtypeStruct((n_batch_pad, ncp), jnp.float32),
        in_specs=[pl.BlockSpec(memory_space=pltpu.MemorySpace.VMEM)] * 3,
        out_specs=pl.BlockSpec(memory_space=pltpu.MemorySpace.VMEM),
    )(pooled_t, wT, b)


def os_cnn_block_forward(x, layer_params, hidden_w, hidden_b,
                         squeeze_layer=True):
    n, _, seq_len = x.shape
    # Pad the batch so N*L is a multiple of 128 (lane-dense kernel columns);
    # padded columns are masked out of the BN statistics inside the kernels.
    q = 128 // math.gcd(seq_len, 128)
    n_batch_pad = ((n + q - 1) // q) * q
    nl_real = n * seq_len
    nlp = n_batch_pad * seq_len

    h = jnp.transpose(x, (1, 0, 2))                       # (C, N, L) channel-major
    if n_batch_pad != n:
        h = jnp.pad(h, ((0, 0), (0, n_batch_pad - n), (0, 0)))

    n_layers = len(layer_params)
    for li, params in enumerate(layer_params):
        xcol = _im2col(h, seq_len, params["max_k"])       # (C_in*K, NLp)
        if squeeze_layer and li == n_layers - 1:
            pool_mat = _pooling_matrix(nlp, n_batch_pad, seq_len, nl_real)
            pooled = _run_layer_pool(xcol, params, pool_mat, nl_real)  # (C_out, Np)
            logits = _run_head(pooled.T, hidden_w, hidden_b)           # (Np, NCp)
            return logits[:n, :hidden_w.shape[0]]
        y2d = _run_layer(xcol, params, nl_real)           # (C_out, NLp)
        h = y2d.reshape(y2d.shape[0], n_batch_pad, seq_len)
    return jnp.transpose(h, (1, 0, 2))[:n]                # squeeze_layer=False


# ----------------------------------------------------------------------------
# Deterministic parameter construction (mirrors creak_layer_mask)
# ----------------------------------------------------------------------------
def calculate_mask_index(kernel_length_now, largest_kernel_length):
    right = (math.ceil((largest_kernel_length - 1) / 2)
             - math.ceil((kernel_length_now - 1) / 2))
    left = largest_kernel_length - kernel_length_now - right
    return left, left + kernel_length_now


def build_layer_params(key, layer_parameters):
    """Zero-padded big weights + static mask, with weight*mask and the
    (C_out, C_in*K) matmul reshape folded in at construction time."""
    k_max = layer_parameters[-1][-1]
    weights, biases = [], []
    for (cin, cout, ks) in layer_parameters:
        key, kw, kb = jax.random.split(key, 3)
        bound = 1.0 / math.sqrt(cin * ks)                 # torch Conv1d default init
        w = jax.random.uniform(kw, (cout, cin, ks), jnp.float32, -bound, bound)
        b = jax.random.uniform(kb, (cout,), jnp.float32, -bound, bound)
        il, ir = calculate_mask_index(ks, k_max)
        big_w = jnp.zeros((cout, cin, k_max), jnp.float32).at[:, :, il:ir].set(w)
        weights.append(big_w)                             # already mask-zeroed
        biases.append(b)
    weight = jnp.concatenate(weights, axis=0)             # (sum C_out, C_in, K_max)
    bias = jnp.concatenate(biases, axis=0)
    c_out, c_in, kk = weight.shape
    params = dict(
        w2d=weight.reshape(c_out, c_in * kk),             # matmul layout
        bias=bias.reshape(c_out, 1),
        gamma=jnp.ones((c_out, 1), jnp.float32),          # BatchNorm1d affine
        beta=jnp.zeros((c_out, 1), jnp.float32),
        max_k=k_max,
    )
    return key, params


# ----------------------------------------------------------------------------
if __name__ == "__main__":
    layer_parameter_list = [
        [(4, 8, 3), (4, 8, 5)],     # layer 0: C_in=4  -> C_out=16, K_max=5
        [(16, 8, 3), (16, 8, 5)],   # layer 1: C_in=16 -> C_out=16, K_max=5
    ]
    n_class = 3

    key = jax.random.PRNGKey(0)
    key, kx = jax.random.split(key)
    x = jax.random.normal(kx, (2, 4, 16), jnp.float32)    # (N, C, L)

    layer_params = []
    for lp in layer_parameter_list:
        key, p = build_layer_params(key, lp)
        layer_params.append(p)

    out_ch = sum(t[1] for t in layer_parameter_list[-1])
    key, kw, kb = jax.random.split(key, 3)
    bound = 1.0 / math.sqrt(out_ch)
    hidden_w = jax.random.uniform(kw, (n_class, out_ch), jnp.float32,
                                  -bound, bound)
    hidden_b = jax.random.uniform(kb, (n_class,), jnp.float32, -bound, bound)

    out = os_cnn_block_forward(x, layer_params, hidden_w, hidden_b,
                               squeeze_layer=True)
    out = jax.block_until_ready(out)
    assert out.shape == (2, n_class) and out.dtype == jnp.float32
    print("KERNEL_OK")
</pallas_src>

<mosaic_0001>
module attributes {stable_mosaic.version = 11 : i64} {
  func.func @_layer_kernel(%arg0: i32, %arg1: memref<20x128xbf16, #tpu.memory_space<vmem>>, %arg2: memref<8x20xf32, #tpu.memory_space<vmem>>, %arg3: memref<8x1xf32, #tpu.memory_space<vmem>>, %arg4: memref<8x1xf32, #tpu.memory_space<vmem>>, %arg5: memref<8x1xf32, #tpu.memory_space<vmem>>, %arg6: memref<8x128xf32, #tpu.memory_space<vmem>>) attributes {dimension_semantics = [#tpu.dimension_semantics<parallel>], iteration_bounds = array<i64: 2>, scalar_prefetch = 0 : i64, scratch_operands = 0 : i64, tpu.core_type = #tpu.core_type<tc>, window_params = [{pipeline_mode = #tpu.pipeline_mode<synchronous>, transform_indices = @transform_0, window_bounds = array<i64: 20, 128>}, {transform_indices = @transform_1, window_bounds = array<i64: 8, 20>}, {transform_indices = @transform_2, window_bounds = array<i64: 8, 1>}, {transform_indices = @transform_3, window_bounds = array<i64: 8, 1>}, {transform_indices = @transform_4, window_bounds = array<i64: 8, 1>}, {transform_indices = @transform_5, window_bounds = array<i64: 8, 128>}]} {
    %c0 = arith.constant 0 : index
    %c0_0 = arith.constant 0 : index
    %0 = vector.load %arg1[%c0, %c0_0] : memref<20x128xbf16, #tpu.memory_space<vmem>>, vector<20x128xbf16>
    %c0_1 = arith.constant 0 : index
    %c0_2 = arith.constant 0 : index
    %1 = vector.load %arg2[%c0_1, %c0_2] : memref<8x20xf32, #tpu.memory_space<vmem>>, vector<8x20xf32>
    %2 = arith.truncf %1 : vector<8x20xf32> to vector<8x20xbf16>
    %cst = arith.constant dense<0.000000e+00> : vector<8x128xf32>
    %3 = tpu.matmul %2, %0, %cst {dimension_numbers = #tpu.dot_dimension_numbers<[1], [0], [0], [1], [0, 0, 1, 1], [], []>} : vector<8x20xbf16>, vector<20x128xbf16>, vector<8x128xf32> -> vector<8x128xf32>
    %c0_3 = arith.constant 0 : index
    %c0_4 = arith.constant 0 : index
    %4 = vector.load %arg3[%c0_3, %c0_4] : memref<8x1xf32, #tpu.memory_space<vmem>>, vector<8x1xf32>
    %5 = vector.broadcast %4 : vector<8x1xf32> to vector<8x128xf32>
    %6 = arith.addf %3, %5 : vector<8x128xf32>
    %7 = tpu.iota {dimensions = array<i32: 1>} : vector<1x128xi32>
    %c32_i32 = arith.constant 32 : i32
    %8 = vector.broadcast %c32_i32 : i32 to vector<1x128xi32>
    %9 = arith.cmpi slt, %7, %8 : vector<1x128xi32>
    %10 = arith.extui %9 : vector<1x128xi1> to vector<1x128xi32>
    %11 = arith.sitofp %10 : vector<1x128xi32> to vector<1x128xf32>
    %12 = vector.broadcast %11 : vector<1x128xf32> to vector<8x128xf32>
    %13 = arith.mulf %6, %12 : vector<8x128xf32>
    %cst_5 = arith.constant dense<0.000000e+00> : vector<8xf32>
    %14 = vector.multi_reduction <add>, %13, %cst_5 [1] : vector<8x128xf32> to vector<8xf32>
    %15 = vector.shape_cast %14 : vector<8xf32> to vector<8x1xf32>
    %cst_6 = arith.constant 3.125000e-02 : f32
    %16 = vector.broadcast %cst_6 : f32 to vector<8x1xf32>
    %17 = arith.mulf %15, %16 : vector<8x1xf32>
    %18 = vector.broadcast %17 : vector<8x1xf32> to vector<8x128xf32>
    %19 = arith.subf %6, %18 : vector<8x128xf32>
    %20 = vector.broadcast %11 : vector<1x128xf32> to vector<8x128xf32>
    %21 = arith.mulf %19, %20 : vector<8x128xf32>
    %22 = arith.mulf %21, %21 : vector<8x128xf32>
    %cst_7 = arith.constant dense<0.000000e+00> : vector<8xf32>
    %23 = vector.multi_reduction <add>, %22, %cst_7 [1] : vector<8x128xf32> to vector<8xf32>
    %24 = vector.shape_cast %23 : vector<8xf32> to vector<8x1xf32>
    %cst_8 = arith.constant 3.125000e-02 : f32
    %25 = vector.broadcast %cst_8 : f32 to vector<8x1xf32>
    %26 = arith.mulf %24, %25 : vector<8x1xf32>
    %cst_9 = arith.constant 9.99999974E-6 : f32
    %27 = vector.broadcast %cst_9 : f32 to vector<8x1xf32>
    %28 = arith.addf %26, %27 : vector<8x1xf32>
    %29 = math.rsqrt %28 : vector<8x1xf32>
    %30 = vector.broadcast %29 : vector<8x1xf32> to vector<8x128xf32>
    %31 = arith.mulf %21, %30 : vector<8x128xf32>
    %c0_10 = arith.constant 0 : index
    %c0_11 = arith.constant 0 : index
    %32 = vector.load %arg4[%c0_10, %c0_11] : memref<8x1xf32, #tpu.memory_space<vmem>>, vector<8x1xf32>
    %33 = vector.broadcast %32 : vector<8x1xf32> to vector<8x128xf32>
    %34 = arith.mulf %31, %33 : vector<8x128xf32>
    %c0_12 = arith.constant 0 : index
    %c0_13 = arith.constant 0 : index
    %35 = vector.load %arg5[%c0_12, %c0_13] : memref<8x1xf32, #tpu.memory_space<vmem>>, vector<8x1xf32>
    %36 = vector.broadcast %35 : vector<8x1xf32> to vector<8x128xf32>
    %37 = arith.addf %34, %36 : vector<8x128xf32>
    %cst_14 = arith.constant 0.000000e+00 : f32
    %38 = vector.broadcast %cst_14 : f32 to vector<8x128xf32>
    %39 = arith.maximumf %37, %38 : vector<8x128xf32>
    %40 = vector.broadcast %11 : vector<1x128xf32> to vector<8x128xf32>
    %41 = arith.mulf %39, %40 : vector<8x128xf32>
    %c0_15 = arith.constant 0 : index
    %c0_16 = arith.constant 0 : index
    %42 = vector.load %arg6[%c0_15, %c0_16] : memref<8x128xf32, #tpu.memory_space<vmem>>, vector<8x128xf32>
    tpu.vector_store %arg6[%c0_15, %c0_16], %41 {strides = array<i32>} : memref<8x128xf32, #tpu.memory_space<vmem>>, vector<8x128xf32>,
    return
  }
  func.func @transform_0(%arg0: i32) -> (i32, i32) {
    %c0_i32 = arith.constant 0 : i32
    %c0_i32_0 = arith.constant 0 : i32
    %c0_i32_1 = arith.constant 0 : i32
    return %c0_i32, %c0_i32_0 : i32, i32
  }
  func.func @transform_1(%arg0: i32) -> (i32, i32) {
    %c0_i32 = arith.constant 0 : i32
    %c0_i32_0 = arith.constant 0 : i32
    return %arg0, %c0_i32 : i32, i32
  }
  func.func @transform_2(%arg0: i32) -> (i32, i32) {
    %c0_i32 = arith.constant 0 : i32
    %c0_i32_0 = arith.constant 0 : i32
    return %arg0, %c0_i32 : i32, i32
  }
  func.func @transform_3(%arg0: i32) -> (i32, i32) {
    %c0_i32 = arith.constant 0 : i32
    %c0_i32_0 = arith.constant 0 : i32
    return %arg0, %c0_i32 : i32, i32
  }
  func.func @transform_4(%arg0: i32) -> (i32, i32) {
    %c0_i32 = arith.constant 0 : i32
    %c0_i32_0 = arith.constant 0 : i32
    return %arg0, %c0_i32 : i32, i32
  }
  func.func @transform_5(%arg0: i32) -> (i32, i32) {
    %c0_i32 = arith.constant 0 : i32
    %c0_i32_0 = arith.constant 0 : i32
    return %arg0, %c0_i32 : i32, i32
  }
}

</mosaic_0001>

<llo_original>
// kernel: tpu_custom_call.1
$region0: #{tpu_custom_call.1}
  #allocation0 [shape = 'u32[]', space=smem, size = 0x4, offset = 0x4, fixed_abs, tag = 'smem constant byte address 0x4 - core index']
  #allocation1 [shape = 'u32[144,128]{1,0:T(1,128)}', space=vmem, size = 0x12000, scoped, tag = 'internal scratch']
  %s0 = inlined_call_operand.vmem [shape: bf16[20,128], index: 0, kind: input, shape index: {}]
  %s1 = inlined_call_operand.vmem [shape: f32[16,20], index: 1, kind: input, shape index: {}]
  %s2 = inlined_call_operand.vmem [shape: f32[16,1], index: 2, kind: input, shape index: {}]
  %s3 = inlined_call_operand.vmem [shape: f32[16,1], index: 3, kind: input, shape index: {}]
  %s4 = inlined_call_operand.vmem [shape: f32[16,1], index: 4, kind: input, shape index: {}]
  %s5 = inlined_call_operand.hbm [shape: f32[16,128], index: 5, kind: output, shape index: {}]
  %s6 = sld [smem:[#allocation0]]
  $region53: #{tpu_custom_call.1} parent=0
    _
  %s8 = ssub.s32 1, %s6
  %s9 = scalar_select 0, %s8, %s6
  $region1: #{tpu_custom_call.1} parent=0
    #allocation2 [shape = 'u8[8192]{0}', space=vmem, size = 0x2000, scoped, tag = 'output window, operand 0']
    #allocation3 [shape = 's32[2]{0}', space=sflag, size = 0x8, scoped, tag = 'scoped memory for tpu_custom_call.1']
    %10 = vsyncpa [#allocation3], 0
    %s11 = scalar_lea.sflag [#allocation3], 1
    %12 = vsyncpa %s11, 0
    loop: start=0, step=1, limit=4
    $region2: #{tpu_custom_call.1} parent=1 // loop_pre_header
      _
    $region3: #{tpu_custom_call.1} parent=1 // loop_header
      %s14 = sphi 0, %s18
      %p15 = scmp.ge.s32.totalorder %s14, 4
      %s22 = sphi 0, %s22
      %s24 = sphi 0, %s22
      %s25 = sphi 0, %s24
      %s39 = sphi 0, %s25
      %s45 = sphi 0, %s47
      %s48 = sphi 0, %s45
      %s49 = sphi 0, %s48
      %s65 = sphi 0, %s49
      %s71 = sphi 0, %s73
      %s74 = sphi 0, %s71
      %s75 = sphi 0, %s74
      %s91 = sphi 0, %s75
      %s97 = sphi 0, %s99
      %s100 = sphi 0, %s97
      %s101 = sphi 0, %s100
      %s117 = sphi 0, %s101
      %s123 = sphi 0, %s125
      %s126 = sphi 0, %s123
      %s127 = sphi 0, %s126
      %s143 = sphi 0, %s127
      %s149 = sphi 0, %s151
      %s152 = sphi 0, %s149
      %s153 = sphi 0, %s152
      %s169 = sphi 0, %s153
    $region4: #{tpu_custom_call.1} parent=1 // loop_header_branch
      %17 = sbr.rel (%p15) target = $region8
    $region5: #{tpu_custom_call.1} parent=1 // loop_body
      %s19 = ssub.s32 %s14, 1
      %s20 = ssub.s32 %s14, 2
      %s21 = sadd.s32 %s14, 1
      %s23 = sadd.s32 %s22, 1
      %p26 = scmp.eq.s32.totalorder %s14, 1
      %p27 = scmp.ne.s32.totalorder %s22, %s24
      %p28 = scmp.eq.s32.totalorder %s14, 0
      %p29 = por %p27, %p28
      %p30 = scmp.ne.s32.totalorder %s22, %s24
      %p31 = scmp.eq.s32.totalorder %s19, 1
      %p32 = por %p30, %p31
      %p33 = scmp.ne.s32.totalorder %s24, %s25
      %p34 = scmp.eq.s32.totalorder %s19, 0
      %p35 = por %p33, %p34
      %p36 = scmp.ne.s32.totalorder %s24, %s25
      %p37 = scmp.eq.s32.totalorder %s20, 1
      %p38 = por %p36, %p37
      %p40 = scmp.ne.s32.totalorder %s25, %s39
      %p41 = scmp.eq.s32.totalorder %s20, 0
      %p42 = por %p40, %p41
      %s43 = ssub.s32 %s14, %s21
      %p44 = scmp.eq.s32.totalorder %s43, 0
      %s46 = sadd.s32 %s45, 1
      %s47 = scalar_select %p44, %s45, %s46
      %p50 = pneg %p44
      %p51 = scmp.eq.s32.totalorder %s14, 1
      %p52 = por %p50, %p51
      %p53 = scmp.ne.s32.totalorder %s45, %s48
      %p54 = scmp.eq.s32.totalorder %s14, 0
      %p55 = por %p53, %p54
      %p56 = scmp.ne.s32.totalorder %s45, %s48
      %p57 = scmp.eq.s32.totalorder %s19, 1
      %p58 = por %p56, %p57
      %p59 = scmp.ne.s32.totalorder %s48, %s49
      %p60 = scmp.eq.s32.totalorder %s19, 0
      %p61 = por %p59, %p60
      %p62 = scmp.ne.s32.totalorder %s48, %s49
      %p63 = scmp.eq.s32.totalorder %s20, 1
      %p64 = por %p62, %p63
      %p66 = scmp.ne.s32.totalorder %s49, %s65
      %p67 = scmp.eq.s32.totalorder %s20, 0
      %p68 = por %p66, %p67
      %s69 = ssub.s32 %s14, %s21
      %p70 = scmp.eq.s32.totalorder %s69, 0
      %s72 = sadd.s32 %s71, 1
      %s73 = scalar_select %p70, %s71, %s72
      %p76 = pneg %p70
      %p77 = scmp.eq.s32.totalorder %s14, 1
      %p78 = por %p76, %p77
      %p79 = scmp.ne.s32.totalorder %s71, %s74
      %p80 = scmp.eq.s32.totalorder %s14, 0
      %p81 = por %p79, %p80
      %p82 = scmp.ne.s32.totalorder %s71, %s74
      %p83 = scmp.eq.s32.totalorder %s19, 1
      %p84 = por %p82, %p83
      %p85 = scmp.ne.s32.totalorder %s74, %s75
      %p86 = scmp.eq.s32.totalorder %s19, 0
      %p87 = por %p85, %p86
      %p88 = scmp.ne.s32.totalorder %s74, %s75
      %p89 = scmp.eq.s32.totalorder %s20, 1
      %p90 = por %p88, %p89
      %p92 = scmp.ne.s32.totalorder %s75, %s91
      %p93 = scmp.eq.s32.totalorder %s20, 0
      %p94 = por %p92, %p93
      %s95 = ssub.s32 %s14, %s21
      %p96 = scmp.eq.s32.totalorder %s95, 0
      %s98 = sadd.s32 %s97, 1
      %s99 = scalar_select %p96, %s97, %s98
      %p102 = pneg %p96
      %p103 = scmp.eq.s32.totalorder %s14, 1
      %p104 = por %p102, %p103
      %p105 = scmp.ne.s32.totalorder %s97, %s100
      %p106 = scmp.eq.s32.totalorder %s14, 0
      %p107 = por %p105, %p106
      %p108 = scmp.ne.s32.totalorder %s97, %s100
      %p109 = scmp.eq.s32.totalorder %s19, 1
      %p110 = por %p108, %p109
      %p111 = scmp.ne.s32.totalorder %s100, %s101
      %p112 = scmp.eq.s32.totalorder %s19, 0
      %p113 = por %p111, %p112
      %p114 = scmp.ne.s32.totalorder %s100, %s101
      %p115 = scmp.eq.s32.totalorder %s20, 1
      %p116 = por %p114, %p115
      %p118 = scmp.ne.s32.totalorder %s101, %s117
      %p119 = scmp.eq.s32.totalorder %s20, 0
      %p120 = por %p118, %p119
      %s121 = ssub.s32 %s14, %s21
      %p122 = scmp.eq.s32.totalorder %s121, 0
      %s124 = sadd.s32 %s123, 1
      %s125 = scalar_select %p122, %s123, %s124
      %p128 = pneg %p122
      %p129 = scmp.eq.s32.totalorder %s14, 1
      %p130 = por %p128, %p129
      %p131 = scmp.ne.s32.totalorder %s123, %s126
      %p132 = scmp.eq.s32.totalorder %s14, 0
      %p133 = por %p131, %p132
      %p134 = scmp.ne.s32.totalorder %s123, %s126
      %p135 = scmp.eq.s32.totalorder %s19, 1
      %p136 = por %p134, %p135
      %p137 = scmp.ne.s32.totalorder %s126, %s127
      %p138 = scmp.eq.s32.totalorder %s19, 0
      %p139 = por %p137, %p138
      %p140 = scmp.ne.s32.totalorder %s126, %s127
      %p141 = scmp.eq.s32.totalorder %s20, 1
      %p142 = por %p140, %p141
      %p144 = scmp.ne.s32.totalorder %s127, %s143
      %p145 = scmp.eq.s32.totalorder %s20, 0
      %p146 = por %p144, %p145
      %s147 = ssub.s32 %s14, %s21
      %p148 = scmp.eq.s32.totalorder %s147, 0
      %s150 = sadd.s32 %s149, 1
      %s151 = scalar_select %p148, %s149, %s150
      %p154 = pneg %p148
      %p155 = scmp.eq.s32.totalorder %s14, 1
      %p156 = por %p154, %p155
      %p157 = scmp.ne.s32.totalorder %s149, %s152
      %p158 = scmp.eq.s32.totalorder %s14, 0
      %p159 = por %p157, %p158
      %p160 = scmp.ne.s32.totalorder %s149, %s152
      %p161 = scmp.eq.s32.totalorder %s19, 1
      %p162 = por %p160, %p161
      %p163 = scmp.ne.s32.totalorder %s152, %s153
      %p164 = scmp.eq.s32.totalorder %s19, 0
      %p165 = por %p163, %p164
      %p166 = scmp.ne.s32.totalorder %s152, %s153
      %p167 = scmp.eq.s32.totalorder %s20, 1
      %p168 = por %p166, %p167
      %p170 = scmp.ne.s32.totalorder %s153, %s169
      %p171 = scmp.eq.s32.totalorder %s20, 0
      %p172 = por %p170, %p171
      %p173 = scmp.le.s32.totalorder 1, %s14
      %p174 = scmp.lt.s32.totalorder %s14, 3
      %p175 = pnand %p173, %p174
      %p176 = pneg %p175
      // Predicated region
      $region9: #{tpu_custom_call.1} parent=5 // pred_check
        _
      $region10: #{tpu_custom_call.1} parent=5 // pred_check_branch
        %178 = sbr.rel (%p175) target = $region12
      $region11: #{tpu_custom_call.1} parent=5 // pred_region
        %s179 = ssub.s32 %s14, 1
        // Predicated region
        $region13: #{tpu_custom_call.1} parent=11 // pred_check
          %p180 = pneg %p35
        $region14: #{tpu_custom_call.1} parent=11 // pred_check_branch
          %182 = sbr.rel (%p180) target = $region16
        $region15: #{tpu_custom_call.1} parent=11 // pred_region
          _
        $region16: #{tpu_custom_call.1} parent=11 // pred_fallthru
          _
      $region12: #{tpu_custom_call.1} parent=5 // pred_fallthru
        _
      %p183 = scmp.lt.s32.totalorder %s14, 2
      // Predicated region
      $region17: #{tpu_custom_call.1} parent=5 // pred_check
        %p184 = pneg %p183
      $region18: #{tpu_custom_call.1} parent=5 // pred_check_branch
        %186 = sbr.rel (%p184) target = $region20
      $region19: #{tpu_custom_call.1} parent=5 // pred_region
        // Predicated region
        $region21: #{tpu_custom_call.1} parent=19 // pred_check
          %p187 = pneg %p55
        $region22: #{tpu_custom_call.1} parent=19 // pred_check_branch
          %189 = sbr.rel (%p187) target = $region24
        $region23: #{tpu_custom_call.1} parent=19 // pred_region
          %p190 = scmp.lt.s32.totalorder %s14, 1
          %s191 = scalar_select %p190, %s14, 1
          %s192 = smul.addr %s191, 8
          %s193 = scalar_lea.vmem %s1, %s192
        $region24: #{tpu_custom_call.1} parent=19 // pred_fallthru
          _
        // Predicated region
        $region25: #{tpu_custom_call.1} parent=19 // pred_check
          %p194 = pneg %p81
        $region26: #{tpu_custom_call.1} parent=19 // pred_check_branch
          %196 = sbr.rel (%p194) target = $region28
        $region27: #{tpu_custom_call.1} parent=19 // pred_region
          %p197 = scmp.lt.s32.totalorder %s14, 1
          %s198 = scalar_select %p197, %s14, 1
          %s199 = smul.addr %s198, 8
          %s200 = scalar_lea.vmem %s2, %s199
        $region28: #{tpu_custom_call.1} parent=19 // pred_fallthru
          _
        // Predicated region
        $region29: #{tpu_custom_call.1} parent=19 // pred_check
          %p201 = pneg %p107
        $region30: #{tpu_custom_call.1} parent=19 // pred_check_branch
          %203 = sbr.rel (%p201) target = $region32
        $region31: #{tpu_custom_call.1} parent=19 // pred_region
          %p204 = scmp.lt.s32.totalorder %s14, 1
          %s205 = scalar_select %p204, %s14, 1
          %s206 = smul.addr %s205, 8
          %s207 = scalar_lea.vmem %s3, %s206
        $region32: #{tpu_custom_call.1} parent=19 // pred_fallthru
          _
        // Predicated region
        $region33: #{tpu_custom_call.1} parent=19 // pred_check
          %p208 = pneg %p133
        $region34: #{tpu_custom_call.1} parent=19 // pred_check_branch
          %210 = sbr.rel (%p208) target = $region36
        $region35: #{tpu_custom_call.1} parent=19 // pred_region
          %p211 = scmp.lt.s32.totalorder %s14, 1
          %s212 = scalar_select %p211, %s14, 1
          %s213 = smul.addr %s212, 8
          %s214 = scalar_lea.vmem %s4, %s213
        $region36: #{tpu_custom_call.1} parent=19 // pred_fallthru
          _
      $region20: #{tpu_custom_call.1} parent=5 // pred_fallthru
        _
      %p215 = scmp.le.s32.totalorder 1, %s14
      %p216 = scmp.lt.s32.totalorder %s14, 3
      %p217 = pnand %p215, %p216
      %p218 = pneg %p217
      // Predicated region
      $region37: #{tpu_custom_call.1} parent=5 // pred_check
        _
      $region38: #{tpu_custom_call.1} parent=5 // pred_check_branch
        %220 = sbr.rel (%p217) target = $region40
      $region39: #{tpu_custom_call.1} parent=5 // pred_region
        %s221 = ssub.s32 %s14, 1
        %p222 = pneg %p35
        %p223 = pneg %p32
        %p224 = scmp.lt.s32.totalorder %s19, 1
        %s225 = scalar_select %p224, %s19, 1
        %s226 = smul.addr %s225, 8
        %s227 = scalar_lea.vmem %s1, %s226
        %p228 = pneg %p61
        %p229 = pneg %p58
        %p230 = scmp.lt.s32.totalorder %s19, 1
        %s231 = scalar_select %p230, %s19, 1
        %s232 = smul.addr %s231, 8
        %s233 = scalar_lea.vmem %s2, %s232
        %p234 = pneg %p87
        %p235 = pneg %p84
        %p236 = scmp.lt.s32.totalorder %s19, 1
        %s237 = scalar_select %p236, %s19, 1
        %s238 = smul.addr %s237, 8
        %s239 = scalar_lea.vmem %s3, %s238
        %p240 = pneg %p113
        %p241 = pneg %p110
        %p242 = scmp.lt.s32.totalorder %s19, 1
        %s243 = scalar_select %p242, %s19, 1
        %s244 = smul.addr %s243, 8
        %s245 = scalar_lea.vmem %s4, %s244
        %p246 = pneg %p139
        %p247 = pneg %p136
        %p248 = pneg %p165
        %p249 = pneg %p162
        %s250 = sand.u32 %s152, 1
        %s251 = scalar_lea.sflag [#allocation3], %s250
        %s252 = sand.u32 %s152, 1
        %s253 = smul.addr %s252, 8
        %s254 = scalar_lea.vmem [#allocation2], %s253
        %p255 = scmp.lt.s32.totalorder %s19, 1
        %s256 = scalar_select %p255, %s19, 1
        %s257 = smul.addr %s256, 8
        %s258 = scalar_lea.vmem %s1, %s257
        %p259 = scmp.lt.s32.totalorder %s19, 1
        %s260 = scalar_select %p259, %s19, 1
        %s261 = smul.addr %s260, 8
        %s262 = scalar_lea.vmem %s2, %s261
        %p263 = scmp.lt.s32.totalorder %s19, 1
        %s264 = scalar_select %p263, %s19, 1
        %s265 = smul.addr %s264, 8
        %s266 = scalar_lea.vmem %s3, %s265
        %p267 = scmp.lt.s32.totalorder %s19, 1
        %s268 = scalar_select %p267, %s19, 1
        %s269 = smul.addr %s268, 8
        %s270 = scalar_lea.vmem %s4, %s269
        %v272 = vld [vmem:[%s0] sm:$0xf]
        %v273 = vld [vmem:[%s0 + $0x4] sm:$0xf]
        %v274 = vld [vmem:[%s0 + $0x8] sm:$0x3]
        %v275 = vld [vmem:[%s258] sm:$0xff]
        %v276 = vpack.c.bf16 %v275, %v275
        %v277 = vld [vmem:[%s262] sm:$0xff]
        %279 = vset.pattern.permute.xlu0 0
        %280 = vperm.xlu0 %279, %v277
        %v281 = vpop.permute.xlu0 %280
        %v286 = vunpack.c.l.b16 %v272
        %v287 = vunpack.c.l.b16 %v273
        %v288 = vunpack.c.l.b16 %v274
        %v289 = vpack.c.b16 %v287, %v286
        %v290 = vpack.c.b16 %v288, %v288
        %vm292 = vcmask 162816
        %v294 = vsel %vm292, %v276, 0
        %vm296 = vcmask 1041408
        %v298 = vsel %vm296, %v290, 0
        %300 = vmatprep.subr.bf16.mxu0 0
        %301 = vmatpush1.bf16.msra.mxu0 %v289
        %302 = vmatprep.subr.bf16.mxu0 0
        %303 = vmatpush1.bf16.msra.mxu0 %v298
        %304 = vmatprep.subr.bf16.mxu0 0
        %305 = vmatpush1.bf16.msra.mxu0 0
        %306 = vmatprep.subr.bf16.mxu0 0
        %307 = vmatpush1.bf16.msra.mxu0 0
        %308 = vmatprep.subr.bf16.mxu0 0
        %309 = vmatpush1.bf16.msra.mxu0 0
        %310 = vmatprep.subr.bf16.mxu0 0
        %311 = vmatpush1.bf16.msra.mxu0 0
        %312 = vmatprep.subr.bf16.mxu0 0
        %313 = vmatpush1.bf16.msra.mxu0 0
        %314 = vmatprep.subr.bf16.mxu0 0
        %315 = vmatpush1.bf16.msra.mxu0 0
        %316 = vmatprep.subr.bf16.mxu0 0
        %317 = vmatpush1.bf16.msra.mxu0 0
        %318 = vmatprep.subr.bf16.mxu0 0
        %319 = vmatpush1.bf16.msra.mxu0 0
        %320 = vmatprep.subr.bf16.mxu0 0
        %321 = vmatpush1.bf16.msra.mxu0 0
        %322 = vmatprep.subr.bf16.mxu0 0
        %323 = vmatpush1.bf16.msra.mxu0 0
        %324 = vmatprep.subr.bf16.mxu0 0
        %325 = vmatpush1.bf16.msra.mxu0 0
        %326 = vmatprep.subr.bf16.mxu0 0
        %327 = vmatpush1.bf16.msra.mxu0 0
        %328 = vmatprep.subr.bf16.mxu0 0
        %329 = vmatpush1.bf16.msra.mxu0 0
        %330 = vmatprep.subr.bf16.mxu0 0
        %331 = vmatpush1.bf16.msra.mxu0 0
        %332 = vmatprep.mubr.bf16.mxu0 0
        %333 = vmatmul.mubr.bf16.gmra.mrb[0].mxu0 %v294
        %v334 = vpop.f32.mrb[0].mxu0
        %v335 = vadd.f32 %v281, %v334
        %v336 = vpop.f32.mrb[0].mxu0
        %v337 = vpop.f32.mrb[0].mxu0
        %v338 = vpop.f32.mrb[0].mxu0
        %339 = vdwg.mxu0
        %v340 = vlaneseq
        %v341 = vand.u32 %v340, 127
        %vm342 = vcmp.lt.s32.totalorder %v341, 32
        %v343 = vsel %vm342, 1, 0
        %v344 = vcvt.s32.f32 %v343
        %v345 = vmul.f32 %v335, %v344
        %346 = vadd.xlane.f32.xlu0 %v345
        %v347 = vpop.xlane.xlu0 %346
        %v348 = vmul.f32 %v347, 0.03125
        %v349 = vsub.f32 %v335, %v348
        %v350 = vmul.f32 %v349, %v344
        %v351 = vmul.f32 %v350, %v350
        %352 = vadd.xlane.f32.xlu0 %v351
        %v353 = vpop.xlane.xlu0 %352
        %v354 = vmul.f32 %v353, 0.03125
        %v355 = vadd.f32 %v354, 1e-05
        %v356 = vrsqrt.pop %v355
        %v357 = vmul.f32 %v350, %v356
        %v358 = vld [vmem:[%s266] sm:$0xff]
        %360 = vset.pattern.permute.xlu0 0
        %361 = vperm.xlu0 %360, %v358
        %v362 = vpop.permute.xlu0 %361
        %v364 = vmul.f32 %v357, %v362
        %v365 = vld [vmem:[%s270] sm:$0xff]
        %367 = vset.pattern.permute.xlu0 0
        %368 = vperm.xlu0 %367, %v365
        %v369 = vpop.permute.xlu0 %368
        %v371 = vadd.f32 %v364, %v369
        %v372 = vmax.f32 %v371, 0.0
        %v373 = vmul.f32 %v372, %v344
        %374 = vst [vmem:[%s254] sm:$0xff] %v373
        %s375 = sand.u32 %s152, 1
        %s376 = scalar_lea.sflag [#allocation3], %s375
        %s377 = sand.u32 %s152, 1
        %s378 = smul.addr %s377, 8
        %s379 = scalar_lea.vmem [#allocation2], %s378
        // Predicated region
        $region41: #{tpu_custom_call.1} parent=39 // pred_check
          %p380 = pneg %p162
        $region42: #{tpu_custom_call.1} parent=39 // pred_check_branch
          %382 = sbr.rel (%p380) target = $region44
        $region43: #{tpu_custom_call.1} parent=39 // pred_region
          %s384 = ssub.s32 128, 128
          %385 = vsyncadd %s376, %s384
          %s386 = smul.addr %s19, 128
          %s387 = scalar_lea.hbm %s5, %s386
          %s389 = sshll.u32 %s379, 4
          %s390 = int_to_ptr.vmem [resolvable:$true] %s389
          %392 = dma.vmem_to_hbm [thread:$0]  %s390, 128, %s387, %s376
        $region44: #{tpu_custom_call.1} parent=39 // pred_fallthru
          _
      $region40: #{tpu_custom_call.1} parent=5 // pred_fallthru
        _
      %p393 = scmp.le.s32.totalorder 2, %s14
      // Predicated region
      $region45: #{tpu_custom_call.1} parent=5 // pred_check
        %p394 = pneg %p393
      $region46: #{tpu_custom_call.1} parent=5 // pred_check_branch
        %396 = sbr.rel (%p394) target = $region48
      $region47: #{tpu_custom_call.1} parent=5 // pred_region
        %s397 = ssub.s32 %s14, 2
        // Predicated region
        $region49: #{tpu_custom_call.1} parent=47 // pred_check
          %p398 = pneg %p168
        $region50: #{tpu_custom_call.1} parent=47 // pred_check_branch
          %400 = sbr.rel (%p398) target = $region52
        $region51: #{tpu_custom_call.1} parent=47 // pred_region
          %s401 = sand.u32 %s153, 1
          %s402 = scalar_lea.sflag [#allocation3], %s401
          %s403 = sand.u32 %s153, 1
          %s404 = smul.addr %s403, 8
          %s405 = scalar_lea.vmem [#allocation2], %s404
          %406 = dma.done %s402, 128
        $region52: #{tpu_custom_call.1} parent=47 // pred_fallthru
          _
      $region48: #{tpu_custom_call.1} parent=5 // pred_fallthru
        _
    $region6: #{tpu_custom_call.1} parent=1 // loop_footer
      %s18 = sadd.s32 1, %s14
    $region7: #{tpu_custom_call.1} parent=1 // loop_footer_branch
      %13 = sbr.rel target = $region3
    $region8: #{tpu_custom_call.1} parent=1 // loop_exit
      _
    %407 = vsyncpa [#allocation3], 1
    %s408 = scalar_lea.sflag [#allocation3], 1
    %409 = vsyncpa %s408, 1

</llo_original>
